<compile_context>
chip_gen: v5e
topology: v5e:2x2
jax: 0.10.0
libtpu: 0.0.40
codegen_flags: <defaults>
</compile_context>

<pallas_src>
import functools
import math

import jax
import jax.numpy as jnp
from jax.experimental import pallas as pl
from jax.experimental.pallas import tpu as pltpu

_LANES = 128


def _round_up(x, m):
    return ((x + m - 1) // m) * m


def _spatial_attn_kernel(x_ref, w1_ref, b1_ref, w2_ref, b2_ref, o_ref, *,
                         c_in, c_hid, chunk_rows, num_chunks):
    # x_ref / o_ref: (1, C, tile_r, 128) VMEM blocks (pixels dense on
    # sublanes x lanes).  w1_ref: (2C, C), b1_ref: (2C,), w2_ref: (C, 2C),
    # b2_ref: (C,) live in SMEM and are read as scalars -> unrolled VPU mix.

    def process(rows):
        # One (chunk_rows, 128) slab per input channel, upcast for compute
        # (v5e has no bf16 VALU; bf16 I/O still halves HBM traffic).
        xs = [x_ref[0, k, rows, :].astype(jnp.float32) for k in range(c_in)]

        # conv1 (C -> 2C) + ReLU, unrolled broadcast multiply-adds.
        hs = []
        for o in range(c_hid):
            acc = xs[0] * w1_ref[o, 0]
            for k in range(1, c_in):
                acc = acc + xs[k] * w1_ref[o, k]
            hs.append(jnp.maximum(acc + b1_ref[o], 0.0))

        # conv2 (2C -> C) + Sigmoid; exp + approx reciprocal ride the EUP.
        for o in range(c_in):
            acc = hs[0] * w2_ref[o, 0]
            for k in range(1, c_hid):
                acc = acc + hs[k] * w2_ref[o, k]
            z = acc + b2_ref[o]
            y = pl.reciprocal(1.0 + jnp.exp(-z), approx=True)
            o_ref[0, o, rows, :] = y.astype(o_ref.dtype)

    if num_chunks == 1:
        process(pl.ds(0, chunk_rows))
    else:
        def body(i, carry):
            r0 = pl.multiple_of(i * chunk_rows, chunk_rows)
            process(pl.ds(r0, chunk_rows))
            return carry
        jax.lax.fori_loop(0, num_chunks, body, 0)


def spatial_attention(x_nchw, w1, b1, w2, b2, *,
                      target_tile_pixels=131072, chunk_rows=16):
    """Forward pass of SpatialAttention.

    x_nchw: (N, C, H, W).  w1: (2C, C), b1: (2C,), w2: (C, 2C), b2: (C,)
    following the PyTorch Conv2d 1x1 convention (out_ch, in_ch)."""
    N, C, H, W = x_nchw.shape
    C2 = w1.shape[0]
    assert w1.shape == (C2, C) and w2.shape == (C, C2)
    assert b1.shape == (C2,) and b2.shape == (C,)
    assert chunk_rows % 8 == 0

    P = H * W
    R = pl.cdiv(P, _LANES)                       # rows of 128 pixels

    # Pixel tiling: big tiles amortize per-grid-step overhead; rows are a
    # multiple of chunk_rows (itself a multiple of the 8-sublane unit), and we
    # pad P up to a whole number of tiles rather than shrinking the tile.
    target_rows = max(chunk_rows, target_tile_pixels // _LANES)
    tile_r = min(_round_up(R, chunk_rows), _round_up(target_rows, chunk_rows))
    num_tiles = pl.cdiv(R, tile_r)
    if N == 1 and num_tiles == 1 and tile_r > chunk_rows:
        # Give multi-TensorCore chips (v7x) at least two grid steps to shard.
        tile_r = _round_up(pl.cdiv(R, 2), chunk_rows)
        num_tiles = pl.cdiv(R, tile_r)
    R_pad = num_tiles * tile_r
    P_pad = R_pad * _LANES

    x = x_nchw.reshape(N, C, P)                  # free reshape of NCHW
    if P_pad != P:
        # Padded pixels are zeros; they run through the pointwise math and are
        # sliced off below.
        x = jnp.pad(x, ((0, 0), (0, 0), (0, P_pad - P)))
    x = x.reshape(N, C, R_pad, _LANES)           # sublane/lane dense layout

    grid = (N, num_tiles)
    kernel = functools.partial(
        _spatial_attn_kernel, c_in=C, c_hid=C2,
        chunk_rows=chunk_rows, num_chunks=tile_r // chunk_rows)
    smem_spec = pl.BlockSpec(memory_space=pltpu.MemorySpace.SMEM)

    block_bytes = C * tile_r * _LANES * x.dtype.itemsize
    # Double-buffered input + output blocks plus headroom; stay well below
    # v7x's 64 MiB per-core VMEM while exceeding small default scoped limits.
    vmem_limit = min(48 * 1024 * 1024, max(32 * 1024 * 1024, 6 * block_bytes))

    out = pl.pallas_call(
        kernel,
        out_shape=jax.ShapeDtypeStruct((N, C, R_pad, _LANES), x_nchw.dtype),
        grid_spec=pltpu.PrefetchScalarGridSpec(
            num_scalar_prefetch=0,
            grid=grid,
            in_specs=[
                pl.BlockSpec((1, C, tile_r, _LANES),
                             lambda n, t: (n, 0, t, 0)),   # x tile
                smem_spec,   # w1 (2C, C)
                smem_spec,   # b1 (2C,)
                smem_spec,   # w2 (C, 2C)
                smem_spec,   # b2 (C,)
            ],
            out_specs=pl.BlockSpec((1, C, tile_r, _LANES),
                                   lambda n, t: (n, 0, t, 0)),
        ),
        compiler_params=pltpu.CompilerParams(
            dimension_semantics=("parallel", "parallel"),
            vmem_limit_bytes=vmem_limit),
    )(x,
      w1.astype(jnp.float32), b1.astype(jnp.float32),
      w2.astype(jnp.float32), b2.astype(jnp.float32))

    out = out.reshape(N, C, P_pad)
    if P_pad != P:
        out = out[:, :, :P]
    return out.reshape(N, C, H, W)


def _init_conv_params(key, out_ch, in_ch):
    """Deterministic init mimicking PyTorch Conv2d defaults (kaiming uniform)."""
    k_w, k_b = jax.random.split(key)
    fan_in = in_ch  # kernel_size = 1
    bound_w = math.sqrt(1.0 / fan_in) * math.sqrt(3.0)
    w = jax.random.uniform(k_w, (out_ch, in_ch), jnp.float32, -bound_w, bound_w)
    bound_b = 1.0 / math.sqrt(fan_in)
    b = jax.random.uniform(k_b, (out_ch,), jnp.float32, -bound_b, bound_b)
    return w, b


def _reference(x_nchw, w1, b1, w2, b2):
    # Pure-JAX reference of the PyTorch forward (1x1 convs == channel matmuls).
    h = jnp.einsum("oc,nchw->nohw", w1, x_nchw) + b1[None, :, None, None]
    h = jnp.maximum(h, 0.0)
    y = jnp.einsum("oc,nchw->nohw", w2, h) + b2[None, :, None, None]
    return jax.nn.sigmoid(y)


if __name__ == "__main__":
    key = jax.random.PRNGKey(0)
    k_x, k_c1, k_c2 = jax.random.split(key, 3)

    N, C, H, W = 2, 4, 16, 16
    x = jax.random.normal(k_x, (N, C, H, W), jnp.float32)

    w1, b1 = _init_conv_params(k_c1, C * 2, C)   # conv1: C -> 2C
    w2, b2 = _init_conv_params(k_c2, C, C * 2)   # conv2: 2C -> C

    out = spatial_attention(x, w1, b1, w2, b2)
    out = jax.block_until_ready(out)

    ref = _reference(x, w1, b1, w2, b2)
    assert out.shape == (N, C, H, W)
    # Tolerance loosened slightly for the EUP approximate reciprocal used in
    # the sigmoid (pl.reciprocal(..., approx=True)).
    assert jnp.allclose(out, ref, atol=5e-3, rtol=5e-3), float(
        jnp.max(jnp.abs(out - ref)))

    print("KERNEL_OK")
</pallas_src>

<mosaic_0001>
module attributes {stable_mosaic.version = 11 : i64} {
  func.func @_spatial_attn_kernel(%arg0: i32, %arg1: i32, %arg2: memref<1x4x16x128xf32, #tpu.memory_space<vmem>>, %arg3: memref<8x4xf32, #tpu.memory_space<smem>>, %arg4: memref<8xf32, #tpu.memory_space<smem>>, %arg5: memref<4x8xf32, #tpu.memory_space<smem>>, %arg6: memref<4xf32, #tpu.memory_space<smem>>, %arg7: memref<1x4x16x128xf32, #tpu.memory_space<vmem>>) attributes {dimension_semantics = [#tpu.dimension_semantics<parallel>, #tpu.dimension_semantics<parallel>], iteration_bounds = array<i64: 2, 1>, scalar_prefetch = 0 : i64, scratch_operands = 0 : i64, tpu.core_type = #tpu.core_type<tc>, window_params = [{transform_indices = @transform_0, window_bounds = array<i64: 1, 4, 16, 128>}, {transform_indices = @transform_1, window_bounds = array<i64: 8, 4>}, {transform_indices = @transform_2, window_bounds = array<i64: 8>}, {transform_indices = @transform_3, window_bounds = array<i64: 4, 8>}, {transform_indices = @transform_4, window_bounds = array<i64: 4>}, {transform_indices = @transform_5, window_bounds = array<i64: 1, 4, 16, 128>}]} {
    %c0 = arith.constant 0 : index
    %c0_0 = arith.constant 0 : index
    %c0_1 = arith.constant 0 : index
    %c0_2 = arith.constant 0 : index
    %0 = vector.load %arg2[%c0, %c0_0, %c0_1, %c0_2] : memref<1x4x16x128xf32, #tpu.memory_space<vmem>>, vector<1x1x16x128xf32>
    %1 = vector.shape_cast %0 : vector<1x1x16x128xf32> to vector<16x128xf32>
    %c0_3 = arith.constant 0 : index
    %c1 = arith.constant 1 : index
    %c0_4 = arith.constant 0 : index
    %c0_5 = arith.constant 0 : index
    %2 = vector.load %arg2[%c0_3, %c1, %c0_4, %c0_5] : memref<1x4x16x128xf32, #tpu.memory_space<vmem>>, vector<1x1x16x128xf32>
    %3 = vector.shape_cast %2 : vector<1x1x16x128xf32> to vector<16x128xf32>
    %c0_6 = arith.constant 0 : index
    %c2 = arith.constant 2 : index
    %c0_7 = arith.constant 0 : index
    %c0_8 = arith.constant 0 : index
    %4 = vector.load %arg2[%c0_6, %c2, %c0_7, %c0_8] : memref<1x4x16x128xf32, #tpu.memory_space<vmem>>, vector<1x1x16x128xf32>
    %5 = vector.shape_cast %4 : vector<1x1x16x128xf32> to vector<16x128xf32>
    %c0_9 = arith.constant 0 : index
    %c3 = arith.constant 3 : index
    %c0_10 = arith.constant 0 : index
    %c0_11 = arith.constant 0 : index
    %6 = vector.load %arg2[%c0_9, %c3, %c0_10, %c0_11] : memref<1x4x16x128xf32, #tpu.memory_space<vmem>>, vector<1x1x16x128xf32>
    %7 = vector.shape_cast %6 : vector<1x1x16x128xf32> to vector<16x128xf32>
    %c0_12 = arith.constant 0 : index
    %c0_13 = arith.constant 0 : index
    %8 = memref.load %arg3[%c0_12, %c0_13] : memref<8x4xf32, #tpu.memory_space<smem>>
    %9 = vector.broadcast %8 : f32 to vector<16x128xf32>
    %10 = arith.mulf %1, %9 : vector<16x128xf32>
    %c0_14 = arith.constant 0 : index
    %c1_15 = arith.constant 1 : index
    %11 = memref.load %arg3[%c0_14, %c1_15] : memref<8x4xf32, #tpu.memory_space<smem>>
    %12 = vector.broadcast %11 : f32 to vector<16x128xf32>
    %13 = arith.mulf %3, %12 : vector<16x128xf32>
    %14 = arith.addf %10, %13 : vector<16x128xf32>
    %c0_16 = arith.constant 0 : index
    %c2_17 = arith.constant 2 : index
    %15 = memref.load %arg3[%c0_16, %c2_17] : memref<8x4xf32, #tpu.memory_space<smem>>
    %16 = vector.broadcast %15 : f32 to vector<16x128xf32>
    %17 = arith.mulf %5, %16 : vector<16x128xf32>
    %18 = arith.addf %14, %17 : vector<16x128xf32>
    %c0_18 = arith.constant 0 : index
    %c3_19 = arith.constant 3 : index
    %19 = memref.load %arg3[%c0_18, %c3_19] : memref<8x4xf32, #tpu.memory_space<smem>>
    %20 = vector.broadcast %19 : f32 to vector<16x128xf32>
    %21 = arith.mulf %7, %20 : vector<16x128xf32>
    %22 = arith.addf %18, %21 : vector<16x128xf32>
    %c0_20 = arith.constant 0 : index
    %23 = memref.load %arg4[%c0_20] : memref<8xf32, #tpu.memory_space<smem>>
    %24 = vector.broadcast %23 : f32 to vector<16x128xf32>
    %25 = arith.addf %22, %24 : vector<16x128xf32>
    %cst = arith.constant 0.000000e+00 : f32
    %26 = vector.broadcast %cst : f32 to vector<16x128xf32>
    %27 = arith.maximumf %25, %26 : vector<16x128xf32>
    %c1_21 = arith.constant 1 : index
    %c0_22 = arith.constant 0 : index
    %28 = memref.load %arg3[%c1_21, %c0_22] : memref<8x4xf32, #tpu.memory_space<smem>>
    %29 = vector.broadcast %28 : f32 to vector<16x128xf32>
    %30 = arith.mulf %1, %29 : vector<16x128xf32>
    %c1_23 = arith.constant 1 : index
    %c1_24 = arith.constant 1 : index
    %31 = memref.load %arg3[%c1_23, %c1_24] : memref<8x4xf32, #tpu.memory_space<smem>>
    %32 = vector.broadcast %31 : f32 to vector<16x128xf32>
    %33 = arith.mulf %3, %32 : vector<16x128xf32>
    %34 = arith.addf %30, %33 : vector<16x128xf32>
    %c1_25 = arith.constant 1 : index
    %c2_26 = arith.constant 2 : index
    %35 = memref.load %arg3[%c1_25, %c2_26] : memref<8x4xf32, #tpu.memory_space<smem>>
    %36 = vector.broadcast %35 : f32 to vector<16x128xf32>
    %37 = arith.mulf %5, %36 : vector<16x128xf32>
    %38 = arith.addf %34, %37 : vector<16x128xf32>
    %c1_27 = arith.constant 1 : index
    %c3_28 = arith.constant 3 : index
    %39 = memref.load %arg3[%c1_27, %c3_28] : memref<8x4xf32, #tpu.memory_space<smem>>
    %40 = vector.broadcast %39 : f32 to vector<16x128xf32>
    %41 = arith.mulf %7, %40 : vector<16x128xf32>
    %42 = arith.addf %38, %41 : vector<16x128xf32>
    %c1_29 = arith.constant 1 : index
    %43 = memref.load %arg4[%c1_29] : memref<8xf32, #tpu.memory_space<smem>>
    %44 = vector.broadcast %43 : f32 to vector<16x128xf32>
    %45 = arith.addf %42, %44 : vector<16x128xf32>
    %cst_30 = arith.constant 0.000000e+00 : f32
    %46 = vector.broadcast %cst_30 : f32 to vector<16x128xf32>
    %47 = arith.maximumf %45, %46 : vector<16x128xf32>
    %c2_31 = arith.constant 2 : index
    %c0_32 = arith.constant 0 : index
    %48 = memref.load %arg3[%c2_31, %c0_32] : memref<8x4xf32, #tpu.memory_space<smem>>
    %49 = vector.broadcast %48 : f32 to vector<16x128xf32>
    %50 = arith.mulf %1, %49 : vector<16x128xf32>
    %c2_33 = arith.constant 2 : index
    %c1_34 = arith.constant 1 : index
    %51 = memref.load %arg3[%c2_33, %c1_34] : memref<8x4xf32, #tpu.memory_space<smem>>
    %52 = vector.broadcast %51 : f32 to vector<16x128xf32>
    %53 = arith.mulf %3, %52 : vector<16x128xf32>
    %54 = arith.addf %50, %53 : vector<16x128xf32>
    %c2_35 = arith.constant 2 : index
    %c2_36 = arith.constant 2 : index
    %55 = memref.load %arg3[%c2_35, %c2_36] : memref<8x4xf32, #tpu.memory_space<smem>>
    %56 = vector.broadcast %55 : f32 to vector<16x128xf32>
    %57 = arith.mulf %5, %56 : vector<16x128xf32>
    %58 = arith.addf %54, %57 : vector<16x128xf32>
    %c2_37 = arith.constant 2 : index
    %c3_38 = arith.constant 3 : index
    %59 = memref.load %arg3[%c2_37, %c3_38] : memref<8x4xf32, #tpu.memory_space<smem>>
    %60 = vector.broadcast %59 : f32 to vector<16x128xf32>
    %61 = arith.mulf %7, %60 : vector<16x128xf32>
    %62 = arith.addf %58, %61 : vector<16x128xf32>
    %c2_39 = arith.constant 2 : index
    %63 = memref.load %arg4[%c2_39] : memref<8xf32, #tpu.memory_space<smem>>
    %64 = vector.broadcast %63 : f32 to vector<16x128xf32>
    %65 = arith.addf %62, %64 : vector<16x128xf32>
    %cst_40 = arith.constant 0.000000e+00 : f32
    %66 = vector.broadcast %cst_40 : f32 to vector<16x128xf32>
    %67 = arith.maximumf %65, %66 : vector<16x128xf32>
    %c3_41 = arith.constant 3 : index
    %c0_42 = arith.constant 0 : index
    %68 = memref.load %arg3[%c3_41, %c0_42] : memref<8x4xf32, #tpu.memory_space<smem>>
    %69 = vector.broadcast %68 : f32 to vector<16x128xf32>
    %70 = arith.mulf %1, %69 : vector<16x128xf32>
    %c3_43 = arith.constant 3 : index
    %c1_44 = arith.constant 1 : index
    %71 = memref.load %arg3[%c3_43, %c1_44] : memref<8x4xf32, #tpu.memory_space<smem>>
    %72 = vector.broadcast %71 : f32 to vector<16x128xf32>
    %73 = arith.mulf %3, %72 : vector<16x128xf32>
    %74 = arith.addf %70, %73 : vector<16x128xf32>
    %c3_45 = arith.constant 3 : index
    %c2_46 = arith.constant 2 : index
    %75 = memref.load %arg3[%c3_45, %c2_46] : memref<8x4xf32, #tpu.memory_space<smem>>
    %76 = vector.broadcast %75 : f32 to vector<16x128xf32>
    %77 = arith.mulf %5, %76 : vector<16x128xf32>
    %78 = arith.addf %74, %77 : vector<16x128xf32>
    %c3_47 = arith.constant 3 : index
    %c3_48 = arith.constant 3 : index
    %79 = memref.load %arg3[%c3_47, %c3_48] : memref<8x4xf32, #tpu.memory_space<smem>>
    %80 = vector.broadcast %79 : f32 to vector<16x128xf32>
    %81 = arith.mulf %7, %80 : vector<16x128xf32>
    %82 = arith.addf %78, %81 : vector<16x128xf32>
    %c3_49 = arith.constant 3 : index
    %83 = memref.load %arg4[%c3_49] : memref<8xf32, #tpu.memory_space<smem>>
    %84 = vector.broadcast %83 : f32 to vector<16x128xf32>
    %85 = arith.addf %82, %84 : vector<16x128xf32>
    %cst_50 = arith.constant 0.000000e+00 : f32
    %86 = vector.broadcast %cst_50 : f32 to vector<16x128xf32>
    %87 = arith.maximumf %85, %86 : vector<16x128xf32>
    %c4 = arith.constant 4 : index
    %c0_51 = arith.constant 0 : index
    %88 = memref.load %arg3[%c4, %c0_51] : memref<8x4xf32, #tpu.memory_space<smem>>
    %89 = vector.broadcast %88 : f32 to vector<16x128xf32>
    %90 = arith.mulf %1, %89 : vector<16x128xf32>
    %c4_52 = arith.constant 4 : index
    %c1_53 = arith.constant 1 : index
    %91 = memref.load %arg3[%c4_52, %c1_53] : memref<8x4xf32, #tpu.memory_space<smem>>
    %92 = vector.broadcast %91 : f32 to vector<16x128xf32>
    %93 = arith.mulf %3, %92 : vector<16x128xf32>
    %94 = arith.addf %90, %93 : vector<16x128xf32>
    %c4_54 = arith.constant 4 : index
    %c2_55 = arith.constant 2 : index
    %95 = memref.load %arg3[%c4_54, %c2_55] : memref<8x4xf32, #tpu.memory_space<smem>>
    %96 = vector.broadcast %95 : f32 to vector<16x128xf32>
    %97 = arith.mulf %5, %96 : vector<16x128xf32>
    %98 = arith.addf %94, %97 : vector<16x128xf32>
    %c4_56 = arith.constant 4 : index
    %c3_57 = arith.constant 3 : index
    %99 = memref.load %arg3[%c4_56, %c3_57] : memref<8x4xf32, #tpu.memory_space<smem>>
    %100 = vector.broadcast %99 : f32 to vector<16x128xf32>
    %101 = arith.mulf %7, %100 : vector<16x128xf32>
    %102 = arith.addf %98, %101 : vector<16x128xf32>
    %c4_58 = arith.constant 4 : index
    %103 = memref.load %arg4[%c4_58] : memref<8xf32, #tpu.memory_space<smem>>
    %104 = vector.broadcast %103 : f32 to vector<16x128xf32>
    %105 = arith.addf %102, %104 : vector<16x128xf32>
    %cst_59 = arith.constant 0.000000e+00 : f32
    %106 = vector.broadcast %cst_59 : f32 to vector<16x128xf32>
    %107 = arith.maximumf %105, %106 : vector<16x128xf32>
    %c5 = arith.constant 5 : index
    %c0_60 = arith.constant 0 : index
    %108 = memref.load %arg3[%c5, %c0_60] : memref<8x4xf32, #tpu.memory_space<smem>>
    %109 = vector.broadcast %108 : f32 to vector<16x128xf32>
    %110 = arith.mulf %1, %109 : vector<16x128xf32>
    %c5_61 = arith.constant 5 : index
    %c1_62 = arith.constant 1 : index
    %111 = memref.load %arg3[%c5_61, %c1_62] : memref<8x4xf32, #tpu.memory_space<smem>>
    %112 = vector.broadcast %111 : f32 to vector<16x128xf32>
    %113 = arith.mulf %3, %112 : vector<16x128xf32>
    %114 = arith.addf %110, %113 : vector<16x128xf32>
    %c5_63 = arith.constant 5 : index
    %c2_64 = arith.constant 2 : index
    %115 = memref.load %arg3[%c5_63, %c2_64] : memref<8x4xf32, #tpu.memory_space<smem>>
    %116 = vector.broadcast %115 : f32 to vector<16x128xf32>
    %117 = arith.mulf %5, %116 : vector<16x128xf32>
    %118 = arith.addf %114, %117 : vector<16x128xf32>
    %c5_65 = arith.constant 5 : index
    %c3_66 = arith.constant 3 : index
    %119 = memref.load %arg3[%c5_65, %c3_66] : memref<8x4xf32, #tpu.memory_space<smem>>
    %120 = vector.broadcast %119 : f32 to vector<16x128xf32>
    %121 = arith.mulf %7, %120 : vector<16x128xf32>
    %122 = arith.addf %118, %121 : vector<16x128xf32>
    %c5_67 = arith.constant 5 : index
    %123 = memref.load %arg4[%c5_67] : memref<8xf32, #tpu.memory_space<smem>>
    %124 = vector.broadcast %123 : f32 to vector<16x128xf32>
    %125 = arith.addf %122, %124 : vector<16x128xf32>
    %cst_68 = arith.constant 0.000000e+00 : f32
    %126 = vector.broadcast %cst_68 : f32 to vector<16x128xf32>
    %127 = arith.maximumf %125, %126 : vector<16x128xf32>
    %c6 = arith.constant 6 : index
    %c0_69 = arith.constant 0 : index
    %128 = memref.load %arg3[%c6, %c0_69] : memref<8x4xf32, #tpu.memory_space<smem>>
    %129 = vector.broadcast %128 : f32 to vector<16x128xf32>
    %130 = arith.mulf %1, %129 : vector<16x128xf32>
    %c6_70 = arith.constant 6 : index
    %c1_71 = arith.constant 1 : index
    %131 = memref.load %arg3[%c6_70, %c1_71] : memref<8x4xf32, #tpu.memory_space<smem>>
    %132 = vector.broadcast %131 : f32 to vector<16x128xf32>
    %133 = arith.mulf %3, %132 : vector<16x128xf32>
    %134 = arith.addf %130, %133 : vector<16x128xf32>
    %c6_72 = arith.constant 6 : index
    %c2_73 = arith.constant 2 : index
    %135 = memref.load %arg3[%c6_72, %c2_73] : memref<8x4xf32, #tpu.memory_space<smem>>
    %136 = vector.broadcast %135 : f32 to vector<16x128xf32>
    %137 = arith.mulf %5, %136 : vector<16x128xf32>
    %138 = arith.addf %134, %137 : vector<16x128xf32>
    %c6_74 = arith.constant 6 : index
    %c3_75 = arith.constant 3 : index
    %139 = memref.load %arg3[%c6_74, %c3_75] : memref<8x4xf32, #tpu.memory_space<smem>>
    %140 = vector.broadcast %139 : f32 to vector<16x128xf32>
    %141 = arith.mulf %7, %140 : vector<16x128xf32>
    %142 = arith.addf %138, %141 : vector<16x128xf32>
    %c6_76 = arith.constant 6 : index
    %143 = memref.load %arg4[%c6_76] : memref<8xf32, #tpu.memory_space<smem>>
    %144 = vector.broadcast %143 : f32 to vector<16x128xf32>
    %145 = arith.addf %142, %144 : vector<16x128xf32>
    %cst_77 = arith.constant 0.000000e+00 : f32
    %146 = vector.broadcast %cst_77 : f32 to vector<16x128xf32>
    %147 = arith.maximumf %145, %146 : vector<16x128xf32>
    %c7 = arith.constant 7 : index
    %c0_78 = arith.constant 0 : index
    %148 = memref.load %arg3[%c7, %c0_78] : memref<8x4xf32, #tpu.memory_space<smem>>
    %149 = vector.broadcast %148 : f32 to vector<16x128xf32>
    %150 = arith.mulf %1, %149 : vector<16x128xf32>
    %c7_79 = arith.constant 7 : index
    %c1_80 = arith.constant 1 : index
    %151 = memref.load %arg3[%c7_79, %c1_80] : memref<8x4xf32, #tpu.memory_space<smem>>
    %152 = vector.broadcast %151 : f32 to vector<16x128xf32>
    %153 = arith.mulf %3, %152 : vector<16x128xf32>
    %154 = arith.addf %150, %153 : vector<16x128xf32>
    %c7_81 = arith.constant 7 : index
    %c2_82 = arith.constant 2 : index
    %155 = memref.load %arg3[%c7_81, %c2_82] : memref<8x4xf32, #tpu.memory_space<smem>>
    %156 = vector.broadcast %155 : f32 to vector<16x128xf32>
    %157 = arith.mulf %5, %156 : vector<16x128xf32>
    %158 = arith.addf %154, %157 : vector<16x128xf32>
    %c7_83 = arith.constant 7 : index
    %c3_84 = arith.constant 3 : index
    %159 = memref.load %arg3[%c7_83, %c3_84] : memref<8x4xf32, #tpu.memory_space<smem>>
    %160 = vector.broadcast %159 : f32 to vector<16x128xf32>
    %161 = arith.mulf %7, %160 : vector<16x128xf32>
    %162 = arith.addf %158, %161 : vector<16x128xf32>
    %c7_85 = arith.constant 7 : index
    %163 = memref.load %arg4[%c7_85] : memref<8xf32, #tpu.memory_space<smem>>
    %164 = vector.broadcast %163 : f32 to vector<16x128xf32>
    %165 = arith.addf %162, %164 : vector<16x128xf32>
    %cst_86 = arith.constant 0.000000e+00 : f32
    %166 = vector.broadcast %cst_86 : f32 to vector<16x128xf32>
    %167 = arith.maximumf %165, %166 : vector<16x128xf32>
    %c0_87 = arith.constant 0 : index
    %c0_88 = arith.constant 0 : index
    %168 = memref.load %arg5[%c0_87, %c0_88] : memref<4x8xf32, #tpu.memory_space<smem>>
    %169 = vector.broadcast %168 : f32 to vector<16x128xf32>
    %170 = arith.mulf %27, %169 : vector<16x128xf32>
    %c0_89 = arith.constant 0 : index
    %c1_90 = arith.constant 1 : index
    %171 = memref.load %arg5[%c0_89, %c1_90] : memref<4x8xf32, #tpu.memory_space<smem>>
    %172 = vector.broadcast %171 : f32 to vector<16x128xf32>
    %173 = arith.mulf %47, %172 : vector<16x128xf32>
    %174 = arith.addf %170, %173 : vector<16x128xf32>
    %c0_91 = arith.constant 0 : index
    %c2_92 = arith.constant 2 : index
    %175 = memref.load %arg5[%c0_91, %c2_92] : memref<4x8xf32, #tpu.memory_space<smem>>
    %176 = vector.broadcast %175 : f32 to vector<16x128xf32>
    %177 = arith.mulf %67, %176 : vector<16x128xf32>
    %178 = arith.addf %174, %177 : vector<16x128xf32>
    %c0_93 = arith.constant 0 : index
    %c3_94 = arith.constant 3 : index
    %179 = memref.load %arg5[%c0_93, %c3_94] : memref<4x8xf32, #tpu.memory_space<smem>>
    %180 = vector.broadcast %179 : f32 to vector<16x128xf32>
    %181 = arith.mulf %87, %180 : vector<16x128xf32>
    %182 = arith.addf %178, %181 : vector<16x128xf32>
    %c0_95 = arith.constant 0 : index
    %c4_96 = arith.constant 4 : index
    %183 = memref.load %arg5[%c0_95, %c4_96] : memref<4x8xf32, #tpu.memory_space<smem>>
    %184 = vector.broadcast %183 : f32 to vector<16x128xf32>
    %185 = arith.mulf %107, %184 : vector<16x128xf32>
    %186 = arith.addf %182, %185 : vector<16x128xf32>
    %c0_97 = arith.constant 0 : index
    %c5_98 = arith.constant 5 : index
    %187 = memref.load %arg5[%c0_97, %c5_98] : memref<4x8xf32, #tpu.memory_space<smem>>
    %188 = vector.broadcast %187 : f32 to vector<16x128xf32>
    %189 = arith.mulf %127, %188 : vector<16x128xf32>
    %190 = arith.addf %186, %189 : vector<16x128xf32>
    %c0_99 = arith.constant 0 : index
    %c6_100 = arith.constant 6 : index
    %191 = memref.load %arg5[%c0_99, %c6_100] : memref<4x8xf32, #tpu.memory_space<smem>>
    %192 = vector.broadcast %191 : f32 to vector<16x128xf32>
    %193 = arith.mulf %147, %192 : vector<16x128xf32>
    %194 = arith.addf %190, %193 : vector<16x128xf32>
    %c0_101 = arith.constant 0 : index
    %c7_102 = arith.constant 7 : index
    %195 = memref.load %arg5[%c0_101, %c7_102] : memref<4x8xf32, #tpu.memory_space<smem>>
    %196 = vector.broadcast %195 : f32 to vector<16x128xf32>
    %197 = arith.mulf %167, %196 : vector<16x128xf32>
    %198 = arith.addf %194, %197 : vector<16x128xf32>
    %c0_103 = arith.constant 0 : index
    %199 = memref.load %arg6[%c0_103] : memref<4xf32, #tpu.memory_space<smem>>
    %200 = vector.broadcast %199 : f32 to vector<16x128xf32>
    %201 = arith.addf %198, %200 : vector<16x128xf32>
    %cst_104 = arith.constant 0.000000e+00 : f32
    %202 = vector.broadcast %cst_104 : f32 to vector<16x128xf32>
    %203 = arith.subf %202, %201 : vector<16x128xf32>
    %204 = math.exp %203 : vector<16x128xf32>
    %cst_105 = arith.constant 1.000000e+00 : f32
    %205 = vector.broadcast %cst_105 : f32 to vector<16x128xf32>
    %206 = arith.addf %205, %204 : vector<16x128xf32>
    %207 = tpu.reciprocal %206 {approx = true} : vector<16x128xf32> -> vector<16x128xf32>
    %c0_106 = arith.constant 0 : index
    %c0_107 = arith.constant 0 : index
    %c0_108 = arith.constant 0 : index
    %c0_109 = arith.constant 0 : index
    %208 = vector.load %arg7[%c0_106, %c0_107, %c0_108, %c0_109] : memref<1x4x16x128xf32, #tpu.memory_space<vmem>>, vector<1x1x16x128xf32>
    %209 = vector.shape_cast %208 : vector<1x1x16x128xf32> to vector<16x128xf32>
    %210 = vector.shape_cast %207 : vector<16x128xf32> to vector<1x1x16x128xf32>
    tpu.vector_store %arg7[%c0_106, %c0_107, %c0_108, %c0_109], %210 {strides = array<i32>} : memref<1x4x16x128xf32, #tpu.memory_space<vmem>>, vector<1x1x16x128xf32>,
    %c1_110 = arith.constant 1 : index
    %c0_111 = arith.constant 0 : index
    %211 = memref.load %arg5[%c1_110, %c0_111] : memref<4x8xf32, #tpu.memory_space<smem>>
    %212 = vector.broadcast %211 : f32 to vector<16x128xf32>
    %213 = arith.mulf %27, %212 : vector<16x128xf32>
    %c1_112 = arith.constant 1 : index
    %c1_113 = arith.constant 1 : index
    %214 = memref.load %arg5[%c1_112, %c1_113] : memref<4x8xf32, #tpu.memory_space<smem>>
    %215 = vector.broadcast %214 : f32 to vector<16x128xf32>
    %216 = arith.mulf %47, %215 : vector<16x128xf32>
    %217 = arith.addf %213, %216 : vector<16x128xf32>
    %c1_114 = arith.constant 1 : index
    %c2_115 = arith.constant 2 : index
    %218 = memref.load %arg5[%c1_114, %c2_115] : memref<4x8xf32, #tpu.memory_space<smem>>
    %219 = vector.broadcast %218 : f32 to vector<16x128xf32>
    %220 = arith.mulf %67, %219 : vector<16x128xf32>
    %221 = arith.addf %217, %220 : vector<16x128xf32>
    %c1_116 = arith.constant 1 : index
    %c3_117 = arith.constant 3 : index
    %222 = memref.load %arg5[%c1_116, %c3_117] : memref<4x8xf32, #tpu.memory_space<smem>>
    %223 = vector.broadcast %222 : f32 to vector<16x128xf32>
    %224 = arith.mulf %87, %223 : vector<16x128xf32>
    %225 = arith.addf %221, %224 : vector<16x128xf32>
    %c1_118 = arith.constant 1 : index
    %c4_119 = arith.constant 4 : index
    %226 = memref.load %arg5[%c1_118, %c4_119] : memref<4x8xf32, #tpu.memory_space<smem>>
    %227 = vector.broadcast %226 : f32 to vector<16x128xf32>
    %228 = arith.mulf %107, %227 : vector<16x128xf32>
    %229 = arith.addf %225, %228 : vector<16x128xf32>
    %c1_120 = arith.constant 1 : index
    %c5_121 = arith.constant 5 : index
    %230 = memref.load %arg5[%c1_120, %c5_121] : memref<4x8xf32, #tpu.memory_space<smem>>
    %231 = vector.broadcast %230 : f32 to vector<16x128xf32>
    %232 = arith.mulf %127, %231 : vector<16x128xf32>
    %233 = arith.addf %229, %232 : vector<16x128xf32>
    %c1_122 = arith.constant 1 : index
    %c6_123 = arith.constant 6 : index
    %234 = memref.load %arg5[%c1_122, %c6_123] : memref<4x8xf32, #tpu.memory_space<smem>>
    %235 = vector.broadcast %234 : f32 to vector<16x128xf32>
    %236 = arith.mulf %147, %235 : vector<16x128xf32>
    %237 = arith.addf %233, %236 : vector<16x128xf32>
    %c1_124 = arith.constant 1 : index
    %c7_125 = arith.constant 7 : index
    %238 = memref.load %arg5[%c1_124, %c7_125] : memref<4x8xf32, #tpu.memory_space<smem>>
    %239 = vector.broadcast %238 : f32 to vector<16x128xf32>
    %240 = arith.mulf %167, %239 : vector<16x128xf32>
    %241 = arith.addf %237, %240 : vector<16x128xf32>
    %c1_126 = arith.constant 1 : index
    %242 = memref.load %arg6[%c1_126] : memref<4xf32, #tpu.memory_space<smem>>
    %243 = vector.broadcast %242 : f32 to vector<16x128xf32>
    %244 = arith.addf %241, %243 : vector<16x128xf32>
    %cst_127 = arith.constant 0.000000e+00 : f32
    %245 = vector.broadcast %cst_127 : f32 to vector<16x128xf32>
    %246 = arith.subf %245, %244 : vector<16x128xf32>
    %247 = math.exp %246 : vector<16x128xf32>
    %cst_128 = arith.constant 1.000000e+00 : f32
    %248 = vector.broadcast %cst_128 : f32 to vector<16x128xf32>
    %249 = arith.addf %248, %247 : vector<16x128xf32>
    %250 = tpu.reciprocal %249 {approx = true} : vector<16x128xf32> -> vector<16x128xf32>
    %c0_129 = arith.constant 0 : index
    %c1_130 = arith.constant 1 : index
    %c0_131 = arith.constant 0 : index
    %c0_132 = arith.constant 0 : index
    %251 = vector.load %arg7[%c0_129, %c1_130, %c0_131, %c0_132] : memref<1x4x16x128xf32, #tpu.memory_space<vmem>>, vector<1x1x16x128xf32>
    %252 = vector.shape_cast %251 : vector<1x1x16x128xf32> to vector<16x128xf32>
    %253 = vector.shape_cast %250 : vector<16x128xf32> to vector<1x1x16x128xf32>
    tpu.vector_store %arg7[%c0_129, %c1_130, %c0_131, %c0_132], %253 {strides = array<i32>} : memref<1x4x16x128xf32, #tpu.memory_space<vmem>>, vector<1x1x16x128xf32>,
    %c2_133 = arith.constant 2 : index
    %c0_134 = arith.constant 0 : index
    %254 = memref.load %arg5[%c2_133, %c0_134] : memref<4x8xf32, #tpu.memory_space<smem>>
    %255 = vector.broadcast %254 : f32 to vector<16x128xf32>
    %256 = arith.mulf %27, %255 : vector<16x128xf32>
    %c2_135 = arith.constant 2 : index
    %c1_136 = arith.constant 1 : index
    %257 = memref.load %arg5[%c2_135, %c1_136] : memref<4x8xf32, #tpu.memory_space<smem>>
    %258 = vector.broadcast %257 : f32 to vector<16x128xf32>
    %259 = arith.mulf %47, %258 : vector<16x128xf32>
    %260 = arith.addf %256, %259 : vector<16x128xf32>
    %c2_137 = arith.constant 2 : index
    %c2_138 = arith.constant 2 : index
    %261 = memref.load %arg5[%c2_137, %c2_138] : memref<4x8xf32, #tpu.memory_space<smem>>
    %262 = vector.broadcast %261 : f32 to vector<16x128xf32>
    %263 = arith.mulf %67, %262 : vector<16x128xf32>
    %264 = arith.addf %260, %263 : vector<16x128xf32>
    %c2_139 = arith.constant 2 : index
    %c3_140 = arith.constant 3 : index
    %265 = memref.load %arg5[%c2_139, %c3_140] : memref<4x8xf32, #tpu.memory_space<smem>>
    %266 = vector.broadcast %265 : f32 to vector<16x128xf32>
    %267 = arith.mulf %87, %266 : vector<16x128xf32>
    %268 = arith.addf %264, %267 : vector<16x128xf32>
    %c2_141 = arith.constant 2 : index
    %c4_142 = arith.constant 4 : index
    %269 = memref.load %arg5[%c2_141, %c4_142] : memref<4x8xf32, #tpu.memory_space<smem>>
    %270 = vector.broadcast %269 : f32 to vector<16x128xf32>
    %271 = arith.mulf %107, %270 : vector<16x128xf32>
    %272 = arith.addf %268, %271 : vector<16x128xf32>
    %c2_143 = arith.constant 2 : index
    %c5_144 = arith.constant 5 : index
    %273 = memref.load %arg5[%c2_143, %c5_144] : memref<4x8xf32, #tpu.memory_space<smem>>
    %274 = vector.broadcast %273 : f32 to vector<16x128xf32>
    %275 = arith.mulf %127, %274 : vector<16x128xf32>
    %276 = arith.addf %272, %275 : vector<16x128xf32>
    %c2_145 = arith.constant 2 : index
    %c6_146 = arith.constant 6 : index
    %277 = memref.load %arg5[%c2_145, %c6_146] : memref<4x8xf32, #tpu.memory_space<smem>>
    %278 = vector.broadcast %277 : f32 to vector<16x128xf32>
    %279 = arith.mulf %147, %278 : vector<16x128xf32>
    %280 = arith.addf %276, %279 : vector<16x128xf32>
    %c2_147 = arith.constant 2 : index
    %c7_148 = arith.constant 7 : index
    %281 = memref.load %arg5[%c2_147, %c7_148] : memref<4x8xf32, #tpu.memory_space<smem>>
    %282 = vector.broadcast %281 : f32 to vector<16x128xf32>
    %283 = arith.mulf %167, %282 : vector<16x128xf32>
    %284 = arith.addf %280, %283 : vector<16x128xf32>
    %c2_149 = arith.constant 2 : index
    %285 = memref.load %arg6[%c2_149] : memref<4xf32, #tpu.memory_space<smem>>
    %286 = vector.broadcast %285 : f32 to vector<16x128xf32>
    %287 = arith.addf %284, %286 : vector<16x128xf32>
    %cst_150 = arith.constant 0.000000e+00 : f32
    %288 = vector.broadcast %cst_150 : f32 to vector<16x128xf32>
    %289 = arith.subf %288, %287 : vector<16x128xf32>
    %290 = math.exp %289 : vector<16x128xf32>
    %cst_151 = arith.constant 1.000000e+00 : f32
    %291 = vector.broadcast %cst_151 : f32 to vector<16x128xf32>
    %292 = arith.addf %291, %290 : vector<16x128xf32>
    %293 = tpu.reciprocal %292 {approx = true} : vector<16x128xf32> -> vector<16x128xf32>
    %c0_152 = arith.constant 0 : index
    %c2_153 = arith.constant 2 : index
    %c0_154 = arith.constant 0 : index
    %c0_155 = arith.constant 0 : index
    %294 = vector.load %arg7[%c0_152, %c2_153, %c0_154, %c0_155] : memref<1x4x16x128xf32, #tpu.memory_space<vmem>>, vector<1x1x16x128xf32>
    %295 = vector.shape_cast %294 : vector<1x1x16x128xf32> to vector<16x128xf32>
    %296 = vector.shape_cast %293 : vector<16x128xf32> to vector<1x1x16x128xf32>
    tpu.vector_store %arg7[%c0_152, %c2_153, %c0_154, %c0_155], %296 {strides = array<i32>} : memref<1x4x16x128xf32, #tpu.memory_space<vmem>>, vector<1x1x16x128xf32>,
    %c3_156 = arith.constant 3 : index
    %c0_157 = arith.constant 0 : index
    %297 = memref.load %arg5[%c3_156, %c0_157] : memref<4x8xf32, #tpu.memory_space<smem>>
    %298 = vector.broadcast %297 : f32 to vector<16x128xf32>
    %299 = arith.mulf %27, %298 : vector<16x128xf32>
    %c3_158 = arith.constant 3 : index
    %c1_159 = arith.constant 1 : index
    %300 = memref.load %arg5[%c3_158, %c1_159] : memref<4x8xf32, #tpu.memory_space<smem>>
    %301 = vector.broadcast %300 : f32 to vector<16x128xf32>
    %302 = arith.mulf %47, %301 : vector<16x128xf32>
    %303 = arith.addf %299, %302 : vector<16x128xf32>
    %c3_160 = arith.constant 3 : index
    %c2_161 = arith.constant 2 : index
    %304 = memref.load %arg5[%c3_160, %c2_161] : memref<4x8xf32, #tpu.memory_space<smem>>
    %305 = vector.broadcast %304 : f32 to vector<16x128xf32>
    %306 = arith.mulf %67, %305 : vector<16x128xf32>
    %307 = arith.addf %303, %306 : vector<16x128xf32>
    %c3_162 = arith.constant 3 : index
    %c3_163 = arith.constant 3 : index
    %308 = memref.load %arg5[%c3_162, %c3_163] : memref<4x8xf32, #tpu.memory_space<smem>>
    %309 = vector.broadcast %308 : f32 to vector<16x128xf32>
    %310 = arith.mulf %87, %309 : vector<16x128xf32>
    %311 = arith.addf %307, %310 : vector<16x128xf32>
    %c3_164 = arith.constant 3 : index
    %c4_165 = arith.constant 4 : index
    %312 = memref.load %arg5[%c3_164, %c4_165] : memref<4x8xf32, #tpu.memory_space<smem>>
    %313 = vector.broadcast %312 : f32 to vector<16x128xf32>
    %314 = arith.mulf %107, %313 : vector<16x128xf32>
    %315 = arith.addf %311, %314 : vector<16x128xf32>
    %c3_166 = arith.constant 3 : index
    %c5_167 = arith.constant 5 : index
    %316 = memref.load %arg5[%c3_166, %c5_167] : memref<4x8xf32, #tpu.memory_space<smem>>
    %317 = vector.broadcast %316 : f32 to vector<16x128xf32>
    %318 = arith.mulf %127, %317 : vector<16x128xf32>
    %319 = arith.addf %315, %318 : vector<16x128xf32>
    %c3_168 = arith.constant 3 : index
    %c6_169 = arith.constant 6 : index
    %320 = memref.load %arg5[%c3_168, %c6_169] : memref<4x8xf32, #tpu.memory_space<smem>>
    %321 = vector.broadcast %320 : f32 to vector<16x128xf32>
    %322 = arith.mulf %147, %321 : vector<16x128xf32>
    %323 = arith.addf %319, %322 : vector<16x128xf32>
    %c3_170 = arith.constant 3 : index
    %c7_171 = arith.constant 7 : index
    %324 = memref.load %arg5[%c3_170, %c7_171] : memref<4x8xf32, #tpu.memory_space<smem>>
    %325 = vector.broadcast %324 : f32 to vector<16x128xf32>
    %326 = arith.mulf %167, %325 : vector<16x128xf32>
    %327 = arith.addf %323, %326 : vector<16x128xf32>
    %c3_172 = arith.constant 3 : index
    %328 = memref.load %arg6[%c3_172] : memref<4xf32, #tpu.memory_space<smem>>
    %329 = vector.broadcast %328 : f32 to vector<16x128xf32>
    %330 = arith.addf %327, %329 : vector<16x128xf32>
    %cst_173 = arith.constant 0.000000e+00 : f32
    %331 = vector.broadcast %cst_173 : f32 to vector<16x128xf32>
    %332 = arith.subf %331, %330 : vector<16x128xf32>
    %333 = math.exp %332 : vector<16x128xf32>
    %cst_174 = arith.constant 1.000000e+00 : f32
    %334 = vector.broadcast %cst_174 : f32 to vector<16x128xf32>
    %335 = arith.addf %334, %333 : vector<16x128xf32>
    %336 = tpu.reciprocal %335 {approx = true} : vector<16x128xf32> -> vector<16x128xf32>
    %c0_175 = arith.constant 0 : index
    %c3_176 = arith.constant 3 : index
    %c0_177 = arith.constant 0 : index
    %c0_178 = arith.constant 0 : index
    %337 = vector.load %arg7[%c0_175, %c3_176, %c0_177, %c0_178] : memref<1x4x16x128xf32, #tpu.memory_space<vmem>>, vector<1x1x16x128xf32>
    %338 = vector.shape_cast %337 : vector<1x1x16x128xf32> to vector<16x128xf32>
    %339 = vector.shape_cast %336 : vector<16x128xf32> to vector<1x1x16x128xf32>
    tpu.vector_store %arg7[%c0_175, %c3_176, %c0_177, %c0_178], %339 {strides = array<i32>} : memref<1x4x16x128xf32, #tpu.memory_space<vmem>>, vector<1x1x16x128xf32>,
    return
  }
  func.func @transform_0(%arg0: i32, %arg1: i32) -> (i32, i32, i32, i32) {
    %c0_i32 = arith.constant 0 : i32
    %c0_i32_0 = arith.constant 0 : i32
    %c0_i32_1 = arith.constant 0 : i32
    return %arg0, %c0_i32, %arg1, %c0_i32_0 : i32, i32, i32, i32
  }
  func.func @transform_1(%arg0: i32, %arg1: i32) -> (i32, i32) {
    %c0_i32 = arith.constant 0 : i32
    %c0_i32_0 = arith.constant 0 : i32
    %c0_i32_1 = arith.constant 0 : i32
    return %c0_i32, %c0_i32_0 : i32, i32
  }
  func.func @transform_2(%arg0: i32, %arg1: i32) -> i32 {
    %c0_i32 = arith.constant 0 : i32
    %c0_i32_0 = arith.constant 0 : i32
    return %c0_i32 : i32
  }
  func.func @transform_3(%arg0: i32, %arg1: i32) -> (i32, i32) {
    %c0_i32 = arith.constant 0 : i32
    %c0_i32_0 = arith.constant 0 : i32
    %c0_i32_1 = arith.constant 0 : i32
    return %c0_i32, %c0_i32_0 : i32, i32
  }
  func.func @transform_4(%arg0: i32, %arg1: i32) -> i32 {
    %c0_i32 = arith.constant 0 : i32
    %c0_i32_0 = arith.constant 0 : i32
    return %c0_i32 : i32
  }
  func.func @transform_5(%arg0: i32, %arg1: i32) -> (i32, i32, i32, i32) {
    %c0_i32 = arith.constant 0 : i32
    %c0_i32_0 = arith.constant 0 : i32
    %c0_i32_1 = arith.constant 0 : i32
    return %arg0, %c0_i32, %arg1, %c0_i32_0 : i32, i32, i32, i32
  }
}

</mosaic_0001>

<llo_original>
// kernel: tpu_custom_call.1
$region0: #{tpu_custom_call.1}
  #allocation0 [shape = 'u32[]', space=smem, size = 0x4, offset = 0x4, fixed_abs, tag = 'smem constant byte address 0x4 - core index']
  #allocation1 [shape = 'u32[72,128]{1,0:T(1,128)}', space=vmem, size = 0x9000, scoped, tag = 'internal scratch']
  %s0 = inlined_call_operand.hbm [shape: f32[2,4,16,128], index: 0, kind: input, shape index: {}]
  %s1 = inlined_call_operand.vmem [shape: f32[8,4], index: 1, kind: input, shape index: {}]
  %s2 = inlined_call_operand.vmem [shape: f32[8], index: 2, kind: input, shape index: {}]
  %s3 = inlined_call_operand.vmem [shape: f32[4,8], index: 3, kind: input, shape index: {}]
  %s4 = inlined_call_operand.vmem [shape: f32[4], index: 4, kind: input, shape index: {}]
  %s5 = inlined_call_operand.hbm [shape: f32[2,4,16,128], index: 5, kind: output, shape index: {}]
  %s6 = sld [smem:[#allocation0]]
  $region73: #{tpu_custom_call.1} parent=0
    _
  %s8 = ssub.s32 1, %s6
  %s9 = scalar_select 0, %s8, %s6
  $region1: #{tpu_custom_call.1} parent=0
    #allocation2 [shape = 'u8[65536]{0}', space=vmem, size = 0x10000, scoped, tag = 'input window, operand 0']
    #allocation3 [shape = 's32[2]{0}', space=sflag, size = 0x8, scoped, tag = 'scoped memory for tpu_custom_call.1']
    #allocation4 [shape = 's32[2]{0}', space=sflag, size = 0x8, scoped, tag = 'scoped memory for tpu_custom_call.1']
    #allocation5 [shape = 's32[2]{0}', space=sflag, size = 0x8, scoped, tag = 'scoped memory for tpu_custom_call.1']
    #allocation6 [shape = 'u8[4096]{0}', space=smem, size = 0x1000, scoped, tag = 'input window, operand 1, single buffered']
    #allocation7 [shape = 'u8[512]{0}', space=smem, size = 0x200, scoped, tag = 'input window, operand 2, single buffered']
    #allocation8 [shape = 's32[1]{0}', space=sflag, size = 0x4, scoped, tag = 'scoped memory for tpu_custom_call.1']
    #allocation9 [shape = 'u8[2048]{0}', space=smem, size = 0x800, scoped, tag = 'input window, operand 3, single buffered']
    #allocation10 [shape = 'u8[512]{0}', space=smem, size = 0x200, scoped, tag = 'input window, operand 4, single buffered']
    #allocation11 [shape = 's32[1]{0}', space=sflag, size = 0x4, scoped, tag = 'scoped memory for tpu_custom_call.1']
    #allocation12 [shape = 'u8[65536]{0}', space=vmem, size = 0x10000, scoped, tag = 'output window, operand 0']
    %10 = vsyncpa [#allocation3], 0
    %s11 = scalar_lea.sflag [#allocation3], 1
    %12 = vsyncpa %s11, 0
    %13 = vsyncpa [#allocation5], 0
    %14 = vsyncpa [#allocation8], 0
    %15 = vsyncpa [#allocation11], 0
    %16 = vsyncpa [#allocation4], 0
    %s17 = scalar_lea.sflag [#allocation4], 1
    %18 = vsyncpa %s17, 0
    loop: start=0, step=1, limit=4
    $region2: #{tpu_custom_call.1} parent=1 // loop_pre_header
      _
    $region3: #{tpu_custom_call.1} parent=1 // loop_header
      %s20 = sphi 0, %s24
      %p21 = scmp.ge.s32.totalorder %s20, 4
      %s27 = sphi 0, %s39
      %s28 = sphi 0, %s35
      %s29 = sphi 0, %s27
      %s30 = sphi 0, %s28
      %s31 = sphi 0, %s29
      %s32 = sphi 0, %s30
      %s44 = sphi 0, %s46
      %s47 = sphi 0, %s44
      %s48 = sphi 0, %s47
      %s64 = sphi 0, %s48
      %s68 = sphi 0, %s68
      %s70 = sphi 0, %s68
      %s71 = sphi 0, %s70
      %s85 = sphi 0, %s71
      %s89 = sphi 0, %s89
      %s91 = sphi 0, %s89
      %s92 = sphi 0, %s91
      %s106 = sphi 0, %s92
      %s110 = sphi 0, %s110
      %s112 = sphi 0, %s110
      %s113 = sphi 0, %s112
      %s127 = sphi 0, %s113
      %s131 = sphi 0, %s131
      %s133 = sphi 0, %s131
      %s134 = sphi 0, %s133
      %s148 = sphi 0, %s134
      %s156 = sphi 0, %s158
      %s159 = sphi 0, %s156
      %s160 = sphi 0, %s159
      %s176 = sphi 0, %s160
    $region4: #{tpu_custom_call.1} parent=1 // loop_header_branch
      %23 = sbr.rel (%p21) target = $region8
    $region5: #{tpu_custom_call.1} parent=1 // loop_body
      %s25 = ssub.s32 %s20, 1
      %s26 = ssub.s32 %s20, 2
      %s33 = sadd.s32 1, %s28
      %p34 = scmp.ge.s32.totalorder %s33, 1
      %s35 = scalar_select %p34, 0, %s33
      %s36 = sadd.s32 1, %s27
      %s37 = scalar_select %p34, %s36, %s27
      %p38 = scmp.ge.s32.totalorder %s37, 2
      %s39 = scalar_select %p38, 0, %s37
      %s40 = ssub.s32 %s27, %s39
      %s41 = ssub.s32 %s28, %s35
      %s42 = sor.u32 %s40, %s41
      %p43 = scmp.eq.s32.totalorder %s42, 0
      %s45 = sadd.s32 %s44, 1
      %s46 = scalar_select %p43, %s44, %s45
      %p49 = pneg %p43
      %p50 = scmp.eq.s32.totalorder %s20, 1
      %p51 = por %p49, %p50
      %p52 = scmp.ne.s32.totalorder %s44, %s47
      %p53 = scmp.eq.s32.totalorder %s20, 0
      %p54 = por %p52, %p53
      %p55 = scmp.ne.s32.totalorder %s44, %s47
      %p56 = scmp.eq.s32.totalorder %s25, 1
      %p57 = por %p55, %p56
      %p58 = scmp.ne.s32.totalorder %s47, %s48
      %p59 = scmp.eq.s32.totalorder %s25, 0
      %p60 = por %p58, %p59
      %p61 = scmp.ne.s32.totalorder %s47, %s48
      %p62 = scmp.eq.s32.totalorder %s26, 1
      %p63 = por %p61, %p62
      %p65 = scmp.ne.s32.totalorder %s48, %s64
      %p66 = scmp.eq.s32.totalorder %s26, 0
      %p67 = por %p65, %p66
      %s69 = sadd.s32 %s68, 1
      %p72 = scmp.eq.s32.totalorder %s20, 1
      %p73 = scmp.ne.s32.totalorder %s68, %s70
      %p74 = scmp.eq.s32.totalorder %s20, 0
      %p75 = por %p73, %p74
      %p76 = scmp.ne.s32.totalorder %s68, %s70
      %p77 = scmp.eq.s32.totalorder %s25, 1
      %p78 = por %p76, %p77
      %p79 = scmp.ne.s32.totalorder %s70, %s71
      %p80 = scmp.eq.s32.totalorder %s25, 0
      %p81 = por %p79, %p80
      %p82 = scmp.ne.s32.totalorder %s70, %s71
      %p83 = scmp.eq.s32.totalorder %s26, 1
      %p84 = por %p82, %p83
      %p86 = scmp.ne.s32.totalorder %s71, %s85
      %p87 = scmp.eq.s32.totalorder %s26, 0
      %p88 = por %p86, %p87
      %s90 = sadd.s32 %s89, 1
      %p93 = scmp.eq.s32.totalorder %s20, 1
      %p94 = scmp.ne.s32.totalorder %s89, %s91
      %p95 = scmp.eq.s32.totalorder %s20, 0
      %p96 = por %p94, %p95
      %p97 = scmp.ne.s32.totalorder %s89, %s91
      %p98 = scmp.eq.s32.totalorder %s25, 1
      %p99 = por %p97, %p98
      %p100 = scmp.ne.s32.totalorder %s91, %s92
      %p101 = scmp.eq.s32.totalorder %s25, 0
      %p102 = por %p100, %p101
      %p103 = scmp.ne.s32.totalorder %s91, %s92
      %p104 = scmp.eq.s32.totalorder %s26, 1
      %p105 = por %p103, %p104
      %p107 = scmp.ne.s32.totalorder %s92, %s106
      %p108 = scmp.eq.s32.totalorder %s26, 0
      %p109 = por %p107, %p108
      %s111 = sadd.s32 %s110, 1
      %p114 = scmp.eq.s32.totalorder %s20, 1
      %p115 = scmp.ne.s32.totalorder %s110, %s112
      %p116 = scmp.eq.s32.totalorder %s20, 0
      %p117 = por %p115, %p116
      %p118 = scmp.ne.s32.totalorder %s110, %s112
      %p119 = scmp.eq.s32.totalorder %s25, 1
      %p120 = por %p118, %p119
      %p121 = scmp.ne.s32.totalorder %s112, %s113
      %p122 = scmp.eq.s32.totalorder %s25, 0
      %p123 = por %p121, %p122
      %p124 = scmp.ne.s32.totalorder %s112, %s113
      %p125 = scmp.eq.s32.totalorder %s26, 1
      %p126 = por %p124, %p125
      %p128 = scmp.ne.s32.totalorder %s113, %s127
      %p129 = scmp.eq.s32.totalorder %s26, 0
      %p130 = por %p128, %p129
      %s132 = sadd.s32 %s131, 1
      %p135 = scmp.eq.s32.totalorder %s20, 1
      %p136 = scmp.ne.s32.totalorder %s131, %s133
      %p137 = scmp.eq.s32.totalorder %s20, 0
      %p138 = por %p136, %p137
      %p139 = scmp.ne.s32.totalorder %s131, %s133
      %p140 = scmp.eq.s32.totalorder %s25, 1
      %p141 = por %p139, %p140
      %p142 = scmp.ne.s32.totalorder %s133, %s134
      %p143 = scmp.eq.s32.totalorder %s25, 0
      %p144 = por %p142, %p143
      %p145 = scmp.ne.s32.totalorder %s133, %s134
      %p146 = scmp.eq.s32.totalorder %s26, 1
      %p147 = por %p145, %p146
      %p149 = scmp.ne.s32.totalorder %s134, %s148
      %p150 = scmp.eq.s32.totalorder %s26, 0
      %p151 = por %p149, %p150
      %s152 = ssub.s32 %s27, %s39
      %s153 = ssub.s32 %s28, %s35
      %s154 = sor.u32 %s152, %s153
      %p155 = scmp.eq.s32.totalorder %s154, 0
      %s157 = sadd.s32 %s156, 1
      %s158 = scalar_select %p155, %s156, %s157
      %p161 = pneg %p155
      %p162 = scmp.eq.s32.totalorder %s20, 1
      %p163 = por %p161, %p162
      %p164 = scmp.ne.s32.totalorder %s156, %s159
      %p165 = scmp.eq.s32.totalorder %s20, 0
      %p166 = por %p164, %p165
      %p167 = scmp.ne.s32.totalorder %s156, %s159
      %p168 = scmp.eq.s32.totalorder %s25, 1
      %p169 = por %p167, %p168
      %p170 = scmp.ne.s32.totalorder %s159, %s160
      %p171 = scmp.eq.s32.totalorder %s25, 0
      %p172 = por %p170, %p171
      %p173 = scmp.ne.s32.totalorder %s159, %s160
      %p174 = scmp.eq.s32.totalorder %s26, 1
      %p175 = por %p173, %p174
      %p177 = scmp.ne.s32.totalorder %s160, %s176
      %p178 = scmp.eq.s32.totalorder %s26, 0
      %p179 = por %p177, %p178
      %p180 = scmp.le.s32.totalorder 1, %s20
      %p181 = scmp.lt.s32.totalorder %s20, 3
      %p182 = pnand %p180, %p181
      %p183 = pneg %p182
      // Predicated region
      $region9: #{tpu_custom_call.1} parent=5 // pred_check
        _
      $region10: #{tpu_custom_call.1} parent=5 // pred_check_branch
        %185 = sbr.rel (%p182) target = $region12
      $region11: #{tpu_custom_call.1} parent=5 // pred_region
        %s186 = ssub.s32 %s20, 1
        // Predicated region
        $region13: #{tpu_custom_call.1} parent=11 // pred_check
          %p187 = pneg %p81
        $region14: #{tpu_custom_call.1} parent=11 // pred_check_branch
          %189 = sbr.rel (%p187) target = $region16
        $region15: #{tpu_custom_call.1} parent=11 // pred_region
          %191 = vsyncadd [#allocation5], 0
          %s193 = sshll.u32 %s1, 4
          %s194 = int_to_ptr.vmem [resolvable:$true] %s193
          %196 = dma.vmem_to_smem %s194, 128, [#allocation6], [#allocation5]
        $region16: #{tpu_custom_call.1} parent=11 // pred_fallthru
          _
        // Predicated region
        $region17: #{tpu_custom_call.1} parent=11 // pred_check
          %p197 = pneg %p102
        $region18: #{tpu_custom_call.1} parent=11 // pred_check_branch
          %199 = sbr.rel (%p197) target = $region20
        $region19: #{tpu_custom_call.1} parent=11 // pred_region
          %201 = vsyncadd [#allocation8], 0
          %s203 = sshll.u32 %s2, 4
          %s204 = int_to_ptr.vmem [resolvable:$true] %s203
          %206 = dma.vmem_to_smem %s204, 16, [#allocation7], [#allocation8]
        $region20: #{tpu_custom_call.1} parent=11 // pred_fallthru
          _
        // Predicated region
        $region21: #{tpu_custom_call.1} parent=11 // pred_check
          %p207 = pneg %p123
        $region22: #{tpu_custom_call.1} parent=11 // pred_check_branch
          %209 = sbr.rel (%p207) target = $region24
        $region23: #{tpu_custom_call.1} parent=11 // pred_region
          %211 = vsyncadd [#allocation8], 0
          %s213 = sshll.u32 %s3, 4
          %s214 = int_to_ptr.vmem [resolvable:$true] %s213
          %216 = dma.vmem_to_smem %s214, 64, [#allocation9], [#allocation8]
        $region24: #{tpu_custom_call.1} parent=11 // pred_fallthru
          _
        // Predicated region
        $region25: #{tpu_custom_call.1} parent=11 // pred_check
          %p217 = pneg %p144
        $region26: #{tpu_custom_call.1} parent=11 // pred_check_branch
          %219 = sbr.rel (%p217) target = $region28
        $region27: #{tpu_custom_call.1} parent=11 // pred_region
          %221 = vsyncadd [#allocation11], 0
          %s223 = sshll.u32 %s4, 4
          %s224 = int_to_ptr.vmem [resolvable:$true] %s223
          %226 = dma.vmem_to_smem %s224, 16, [#allocation10], [#allocation11]
        $region28: #{tpu_custom_call.1} parent=11 // pred_fallthru
          _
      $region12: #{tpu_custom_call.1} parent=5 // pred_fallthru
        _
      %p227 = scmp.lt.s32.totalorder %s20, 2
      // Predicated region
      $region29: #{tpu_custom_call.1} parent=5 // pred_check
        %p228 = pneg %p227
      $region30: #{tpu_custom_call.1} parent=5 // pred_check_branch
        %230 = sbr.rel (%p228) target = $region32
      $region31: #{tpu_custom_call.1} parent=5 // pred_region
        // Predicated region
        $region33: #{tpu_custom_call.1} parent=31 // pred_check
          %p231 = pneg %p54
        $region34: #{tpu_custom_call.1} parent=31 // pred_check_branch
          %233 = sbr.rel (%p231) target = $region36
        $region35: #{tpu_custom_call.1} parent=31 // pred_region
          %s234 = sand.u32 %s44, 1
          %s235 = scalar_lea.sflag [#allocation3], %s234
          %s236 = sand.u32 %s44, 1
          %s237 = smul.addr %s236, 64
          %s238 = scalar_lea.vmem [#allocation2], %s237
          %s239 = smul.u32 2, %s28
          %241 = vsyncadd %s235, 0
          %s242 = smul.addr %s27, 8
          %s243 = sadd.s32 %s239, %s242
          %s244 = smul.addr %s243, 8
          %s245 = scalar_lea.hbm %s0, %s244
          %s246 = sshll.u32 %s245, 4
          %s247 = int_to_ptr.hbm [resolvable:$true] %s246
          %s248 = sshll.u32 %s238, 4
          %s249 = int_to_ptr.vmem [resolvable:$true] %s248
          %254 = dma.hbm_to_vmem [thread:$0]  %s247, 1024, %s249, %s235, 128, 128, 8
        $region36: #{tpu_custom_call.1} parent=31 // pred_fallthru
          _
      $region32: #{tpu_custom_call.1} parent=5 // pred_fallthru
        _
      %p255 = scmp.le.s32.totalorder 1, %s20
      %p256 = scmp.lt.s32.totalorder %s20, 3
      %p257 = pnand %p255, %p256
      %p258 = pneg %p257
      // Predicated region
      $region37: #{tpu_custom_call.1} parent=5 // pred_check
        _
      $region38: #{tpu_custom_call.1} parent=5 // pred_check_branch
        %260 = sbr.rel (%p257) target = $region40
      $region39: #{tpu_custom_call.1} parent=5 // pred_region
        %s261 = ssub.s32 %s20, 1
        %s262 = sand.u32 %s47, 1
        %s263 = scalar_lea.sflag [#allocation3], %s262
        %s264 = sand.u32 %s47, 1
        %s265 = smul.addr %s264, 64
        %s266 = scalar_lea.vmem [#allocation2], %s265
        // Predicated region
        $region41: #{tpu_custom_call.1} parent=39 // pred_check
          %p267 = pneg %p60
        $region42: #{tpu_custom_call.1} parent=39 // pred_check_branch
          %269 = sbr.rel (%p267) target = $region44
        $region43: #{tpu_custom_call.1} parent=39 // pred_region
          %271 = dma.done %s263, 1024
        $region44: #{tpu_custom_call.1} parent=39 // pred_fallthru
          _
        // Predicated region
        $region45: #{tpu_custom_call.1} parent=39 // pred_check
          %p272 = pneg %p81
        $region46: #{tpu_custom_call.1} parent=39 // pred_check_branch
          %274 = sbr.rel (%p272) target = $region48
        $region47: #{tpu_custom_call.1} parent=39 // pred_region
          %276 = dma.done [#allocation5], 128
        $region48: #{tpu_custom_call.1} parent=39 // pred_fallthru
          _
        // Predicated region
        $region49: #{tpu_custom_call.1} parent=39 // pred_check
          %p277 = pneg %p102
        $region50: #{tpu_custom_call.1} parent=39 // pred_check_branch
          %279 = sbr.rel (%p277) target = $region52
        $region51: #{tpu_custom_call.1} parent=39 // pred_region
          %281 = dma.done [#allocation8], 16
        $region52: #{tpu_custom_call.1} parent=39 // pred_fallthru
          _
        // Predicated region
        $region53: #{tpu_custom_call.1} parent=39 // pred_check
          %p282 = pneg %p123
        $region54: #{tpu_custom_call.1} parent=39 // pred_check_branch
          %284 = sbr.rel (%p282) target = $region56
        $region55: #{tpu_custom_call.1} parent=39 // pred_region
          %286 = dma.done [#allocation8], 64
        $region56: #{tpu_custom_call.1} parent=39 // pred_fallthru
          _
        // Predicated region
        $region57: #{tpu_custom_call.1} parent=39 // pred_check
          %p287 = pneg %p144
        $region58: #{tpu_custom_call.1} parent=39 // pred_check_branch
          %289 = sbr.rel (%p287) target = $region60
        $region59: #{tpu_custom_call.1} parent=39 // pred_region
          %291 = dma.done [#allocation11], 16
        $region60: #{tpu_custom_call.1} parent=39 // pred_fallthru
          _
        %292 = sfence
        %s293 = sand.u32 %s47, 1
        %s294 = scalar_lea.sflag [#allocation3], %s293
        %s295 = sand.u32 %s47, 1
        %s296 = smul.addr %s295, 64
        %s297 = scalar_lea.vmem [#allocation2], %s296
        %p298 = pneg %p60
        %p299 = pneg %p57
        %p300 = pneg %p81
        %p301 = pneg %p78
        %p302 = pneg %p102
        %p303 = pneg %p99
        %p304 = pneg %p123
        %p305 = pneg %p120
        %p306 = pneg %p144
        %p307 = pneg %p141
        %p308 = pneg %p172
        %p309 = pneg %p169
        %s310 = sand.u32 %s159, 1
        %s311 = scalar_lea.sflag [#allocation4], %s310
        %s312 = sand.u32 %s159, 1
        %s313 = smul.addr %s312, 64
        %s314 = scalar_lea.vmem [#allocation12], %s313
        %s315 = smul.u32 2, %s30
        %s316 = smul.u32 2, %s30
        %v317 = vld [vmem:[%s266] sm:$0xff]
        %v318 = vld [vmem:[%s266 + $0x8] sm:$0xff]
        %s319 = scalar_lea.vmem %s266, 16 [#allocation2]
        %v320 = vld [vmem:[%s319] sm:$0xff]
        %v321 = vld [vmem:[%s319 + $0x8] sm:$0xff]
        %s322 = scalar_lea.vmem %s266, 32 [#allocation2]
        %v323 = vld [vmem:[%s322] sm:$0xff]
        %v324 = vld [vmem:[%s322 + $0x8] sm:$0xff]
        %s325 = scalar_lea.vmem %s266, 48 [#allocation2]
        %v326 = vld [vmem:[%s325] sm:$0xff]
        %v327 = vld [vmem:[%s325 + $0x8] sm:$0xff]
        %s328 = sld [smem:[#allocation6]]
        %v329 = vstv %s328
        %v330 = vmul.f32 %v317, %v329
        %v331 = vmul.f32 %v318, %v329
        %s332 = sld [smem:[#allocation6 + $0x1]]
        %v333 = vstv %s332
        %v334 = vmul.f32 %v320, %v333
        %v335 = vmul.f32 %v321, %v333
        %v336 = vadd.f32 %v330, %v334
        %v337 = vadd.f32 %v331, %v335
        %s338 = sld [smem:[#allocation6 + $0x2]]
        %v339 = vstv %s338
        %v340 = vmul.f32 %v323, %v339
        %v341 = vmul.f32 %v324, %v339
        %v342 = vadd.f32 %v336, %v340
        %v343 = vadd.f32 %v337, %v341
        %s344 = sld [smem:[#allocation6 + $0x3]]
        %v345 = vstv %s344
        %v346 = vmul.f32 %v326, %v345
        %v347 = vmul.f32 %v327, %v345
        %v348 = vadd.f32 %v342, %v346
        %v349 = vadd.f32 %v343, %v347
        %s350 = sld [smem:[#allocation7]]
        %v351 = vstv %s350
        %v352 = vadd.f32 %v348, %v351
        %v353 = vadd.f32 %v349, %v351
        %v354 = vmax.f32 %v352, 0.0
        %v355 = vmax.f32 %v353, 0.0
        %s356 = sld [smem:[#allocation6 + $0x80]]
        %v357 = vstv %s356
        %v358 = vmul.f32 %v317, %v357
        %v359 = vmul.f32 %v318, %v357
        %s360 = sld [smem:[#allocation6 + $0x81]]
        %v361 = vstv %s360
        %v362 = vmul.f32 %v320, %v361
        %v363 = vmul.f32 %v321, %v361
        %v364 = vadd.f32 %v358, %v362
        %v365 = vadd.f32 %v359, %v363
        %s366 = sld [smem:[#allocation6 + $0x82]]
        %v367 = vstv %s366
        %v368 = vmul.f32 %v323, %v367
        %v369 = vmul.f32 %v324, %v367
        %v370 = vadd.f32 %v364, %v368
        %v371 = vadd.f32 %v365, %v369
        %s372 = sld [smem:[#allocation6 + $0x83]]
        %v373 = vstv %s372
        %v374 = vmul.f32 %v326, %v373
        %v375 = vmul.f32 %v327, %v373
        %v376 = vadd.f32 %v370, %v374
        %v377 = vadd.f32 %v371, %v375
        %s378 = sld [smem:[#allocation7 + $0x1]]
        %v379 = vstv %s378
        %v380 = vadd.f32 %v376, %v379
        %v381 = vadd.f32 %v377, %v379
        %v382 = vmax.f32 %v380, 0.0
        %v383 = vmax.f32 %v381, 0.0
        %s384 = sld [smem:[#allocation6 + $0x100]]
        %v385 = vstv %s384
        %v386 = vmul.f32 %v317, %v385
        %v387 = vmul.f32 %v318, %v385
        %s388 = sld [smem:[#allocation6 + $0x101]]
        %v389 = vstv %s388
        %v390 = vmul.f32 %v320, %v389
        %v391 = vmul.f32 %v321, %v389
        %v392 = vadd.f32 %v386, %v390
        %v393 = vadd.f32 %v387, %v391
        %s394 = sld [smem:[#allocation6 + $0x102]]
        %v395 = vstv %s394
        %v396 = vmul.f32 %v323, %v395
        %v397 = vmul.f32 %v324, %v395
        %v398 = vadd.f32 %v392, %v396
        %v399 = vadd.f32 %v393, %v397
        %s400 = sld [smem:[#allocation6 + $0x103]]
        %v401 = vstv %s400
        %v402 = vmul.f32 %v326, %v401
        %v403 = vmul.f32 %v327, %v401
        %v404 = vadd.f32 %v398, %v402
        %v405 = vadd.f32 %v399, %v403
        %s406 = sld [smem:[#allocation7 + $0x2]]
        %v407 = vstv %s406
        %v408 = vadd.f32 %v404, %v407
        %v409 = vadd.f32 %v405, %v407
        %v410 = vmax.f32 %v408, 0.0
        %v411 = vmax.f32 %v409, 0.0
        %s412 = sld [smem:[#allocation6 + $0x180]]
        %v413 = vstv %s412
        %v414 = vmul.f32 %v317, %v413
        %v415 = vmul.f32 %v318, %v413
        %s416 = sld [smem:[#allocation6 + $0x181]]
        %v417 = vstv %s416
        %v418 = vmul.f32 %v320, %v417
        %v419 = vmul.f32 %v321, %v417
        %v420 = vadd.f32 %v414, %v418
        %v421 = vadd.f32 %v415, %v419
        %s422 = sld [smem:[#allocation6 + $0x182]]
        %v423 = vstv %s422
        %v424 = vmul.f32 %v323, %v423
        %v425 = vmul.f32 %v324, %v423
        %v426 = vadd.f32 %v420, %v424
        %v427 = vadd.f32 %v421, %v425
        %s428 = sld [smem:[#allocation6 + $0x183]]
        %v429 = vstv %s428
        %v430 = vmul.f32 %v326, %v429
        %v431 = vmul.f32 %v327, %v429
        %v432 = vadd.f32 %v426, %v430
        %v433 = vadd.f32 %v427, %v431
        %s434 = sld [smem:[#allocation7 + $0x3]]
        %v435 = vstv %s434
        %v436 = vadd.f32 %v432, %v435
        %v437 = vadd.f32 %v433, %v435
        %v438 = vmax.f32 %v436, 0.0
        %v439 = vmax.f32 %v437, 0.0
        %s440 = sld [smem:[#allocation6 + $0x200]]
        %v441 = vstv %s440
        %v442 = vmul.f32 %v317, %v441
        %v443 = vmul.f32 %v318, %v441
        %s444 = sld [smem:[#allocation6 + $0x201]]
        %v445 = vstv %s444
        %v446 = vmul.f32 %v320, %v445
        %v447 = vmul.f32 %v321, %v445
        %v448 = vadd.f32 %v442, %v446
        %v449 = vadd.f32 %v443, %v447
        %s450 = sld [smem:[#allocation6 + $0x202]]
        %v451 = vstv %s450
        %v452 = vmul.f32 %v323, %v451
        %v453 = vmul.f32 %v324, %v451
        %v454 = vadd.f32 %v448, %v452
        %v455 = vadd.f32 %v449, %v453
        %s456 = sld [smem:[#allocation6 + $0x203]]
        %v457 = vstv %s456
        %v458 = vmul.f32 %v326, %v457
        %v459 = vmul.f32 %v327, %v457
        %v460 = vadd.f32 %v454, %v458
        %v461 = vadd.f32 %v455, %v459
        %s462 = sld [smem:[#allocation7 + $0x4]]
        %v463 = vstv %s462
        %v464 = vadd.f32 %v460, %v463
        %v465 = vadd.f32 %v461, %v463
        %v466 = vmax.f32 %v464, 0.0
        %v467 = vmax.f32 %v465, 0.0
        %s468 = sld [smem:[#allocation6 + $0x280]]
        %v469 = vstv %s468
        %v470 = vmul.f32 %v317, %v469
        %v471 = vmul.f32 %v318, %v469
        %s472 = sld [smem:[#allocation6 + $0x281]]
        %v473 = vstv %s472
        %v474 = vmul.f32 %v320, %v473
        %v475 = vmul.f32 %v321, %v473
        %v476 = vadd.f32 %v470, %v474
        %v477 = vadd.f32 %v471, %v475
        %s478 = sld [smem:[#allocation6 + $0x282]]
        %v479 = vstv %s478
        %v480 = vmul.f32 %v323, %v479
        %v481 = vmul.f32 %v324, %v479
        %v482 = vadd.f32 %v476, %v480
        %v483 = vadd.f32 %v477, %v481
        %s484 = sld [smem:[#allocation6 + $0x283]]
        %v485 = vstv %s484
        %v486 = vmul.f32 %v326, %v485
        %v487 = vmul.f32 %v327, %v485
        %v488 = vadd.f32 %v482, %v486
        %v489 = vadd.f32 %v483, %v487
        %s490 = sld [smem:[#allocation7 + $0x5]]
        %v491 = vstv %s490
        %v492 = vadd.f32 %v488, %v491
        %v493 = vadd.f32 %v489, %v491
        %v494 = vmax.f32 %v492, 0.0
        %v495 = vmax.f32 %v493, 0.0
        %s496 = sld [smem:[#allocation6 + $0x300]]
        %v497 = vstv %s496
        %v498 = vmul.f32 %v317, %v497
        %v499 = vmul.f32 %v318, %v497
        %s500 = sld [smem:[#allocation6 + $0x301]]
        %v501 = vstv %s500
        %v502 = vmul.f32 %v320, %v501
        %v503 = vmul.f32 %v321, %v501
        %v504 = vadd.f32 %v498, %v502
        %v505 = vadd.f32 %v499, %v503
        %s506 = sld [smem:[#allocation6 + $0x302]]
        %v507 = vstv %s506
        %v508 = vmul.f32 %v323, %v507
        %v509 = vmul.f32 %v324, %v507
        %v510 = vadd.f32 %v504, %v508
        %v511 = vadd.f32 %v505, %v509
        %s512 = sld [smem:[#allocation6 + $0x303]]
        %v513 = vstv %s512
        %v514 = vmul.f32 %v326, %v513
        %v515 = vmul.f32 %v327, %v513
        %v516 = vadd.f32 %v510, %v514
        %v517 = vadd.f32 %v511, %v515
        %s518 = sld [smem:[#allocation7 + $0x6]]
        %v519 = vstv %s518
        %v520 = vadd.f32 %v516, %v519
        %v521 = vadd.f32 %v517, %v519
        %v522 = vmax.f32 %v520, 0.0
        %v523 = vmax.f32 %v521, 0.0
        %s524 = sld [smem:[#allocation6 + $0x380]]
        %v525 = vstv %s524
        %v526 = vmul.f32 %v317, %v525
        %v527 = vmul.f32 %v318, %v525
        %s528 = sld [smem:[#allocation6 + $0x381]]
        %v529 = vstv %s528
        %v530 = vmul.f32 %v320, %v529
        %v531 = vmul.f32 %v321, %v529
        %v532 = vadd.f32 %v526, %v530
        %v533 = vadd.f32 %v527, %v531
        %s534 = sld [smem:[#allocation6 + $0x382]]
        %v535 = vstv %s534
        %v536 = vmul.f32 %v323, %v535
        %v537 = vmul.f32 %v324, %v535
        %v538 = vadd.f32 %v532, %v536
        %v539 = vadd.f32 %v533, %v537
        %s540 = sld [smem:[#allocation6 + $0x383]]
        %v541 = vstv %s540
        %v542 = vmul.f32 %v326, %v541
        %v543 = vmul.f32 %v327, %v541
        %v544 = vadd.f32 %v538, %v542
        %v545 = vadd.f32 %v539, %v543
        %s546 = sld [smem:[#allocation7 + $0x7]]
        %v547 = vstv %s546
        %v548 = vadd.f32 %v544, %v547
        %v549 = vadd.f32 %v545, %v547
        %v550 = vmax.f32 %v548, 0.0
        %v551 = vmax.f32 %v549, 0.0
        %s552 = sld [smem:[#allocation9]]
        %v553 = vstv %s552
        %v554 = vmul.f32 %v354, %v553
        %v555 = vmul.f32 %v355, %v553
        %s556 = sld [smem:[#allocation9 + $0x1]]
        %v557 = vstv %s556
        %v558 = vmul.f32 %v382, %v557
        %v559 = vmul.f32 %v383, %v557
        %v560 = vadd.f32 %v554, %v558
        %v561 = vadd.f32 %v555, %v559
        %s562 = sld [smem:[#allocation9 + $0x2]]
        %v563 = vstv %s562
        %v564 = vmul.f32 %v410, %v563
        %v565 = vmul.f32 %v411, %v563
        %v566 = vadd.f32 %v560, %v564
        %v567 = vadd.f32 %v561, %v565
        %s568 = sld [smem:[#allocation9 + $0x3]]
        %v569 = vstv %s568
        %v570 = vmul.f32 %v438, %v569
        %v571 = vmul.f32 %v439, %v569
        %v572 = vadd.f32 %v566, %v570
        %v573 = vadd.f32 %v567, %v571
        %s574 = sld [smem:[#allocation9 + $0x4]]
        %v575 = vstv %s574
        %v576 = vmul.f32 %v466, %v575
        %v577 = vmul.f32 %v467, %v575
        %v578 = vadd.f32 %v572, %v576
        %v579 = vadd.f32 %v573, %v577
        %s580 = sld [smem:[#allocation9 + $0x5]]
        %v581 = vstv %s580
        %v582 = vmul.f32 %v494, %v581
        %v583 = vmul.f32 %v495, %v581
        %v584 = vadd.f32 %v578, %v582
        %v585 = vadd.f32 %v579, %v583
        %s586 = sld [smem:[#allocation9 + $0x6]]
        %v587 = vstv %s586
        %v588 = vmul.f32 %v522, %v587
        %v589 = vmul.f32 %v523, %v587
        %v590 = vadd.f32 %v584, %v588
        %v591 = vadd.f32 %v585, %v589
        %s592 = sld [smem:[#allocation9 + $0x7]]
        %v593 = vstv %s592
        %v594 = vmul.f32 %v550, %v593
        %v595 = vmul.f32 %v551, %v593
        %v596 = vadd.f32 %v590, %v594
        %v597 = vadd.f32 %v591, %v595
        %s598 = sld [smem:[#allocation10]]
        %v599 = vstv %s598
        %v600 = vadd.f32 %v596, %v599
        %v601 = vadd.f32 %v597, %v599
        %v602 = vsub.f32 0.0, %v600
        %v603 = vsub.f32 0.0, %v601
        %v604 = vmul.f32 %v602, 1.442695
        %v605 = vpow.pop %v604
        %v606 = vmul.f32 %v603, 1.442695
        %v607 = vpow.pop %v606
        %v608 = vadd.f32 %v605, 1.0
        %v609 = vadd.f32 %v607, 1.0
        %v610 = vrcp.pop %v608
        %v611 = vrcp.pop %v609
        %612 = vst [vmem:[%s314] sm:$0xff] %v610
        %613 = vst [vmem:[%s314 + $0x8] sm:$0xff] %v611
        %s614 = sld [smem:[#allocation9 + $0x80]]
        %v615 = vstv %s614
        %v616 = vmul.f32 %v354, %v615
        %v617 = vmul.f32 %v355, %v615
        %s618 = sld [smem:[#allocation9 + $0x81]]
        %v619 = vstv %s618
        %v620 = vmul.f32 %v382, %v619
        %v621 = vmul.f32 %v383, %v619
        %v622 = vadd.f32 %v616, %v620
        %v623 = vadd.f32 %v617, %v621
        %s624 = sld [smem:[#allocation9 + $0x82]]
        %v625 = vstv %s624
        %v626 = vmul.f32 %v410, %v625
        %v627 = vmul.f32 %v411, %v625
        %v628 = vadd.f32 %v622, %v626
        %v629 = vadd.f32 %v623, %v627
        %s630 = sld [smem:[#allocation9 + $0x83]]
        %v631 = vstv %s630
        %v632 = vmul.f32 %v438, %v631
        %v633 = vmul.f32 %v439, %v631
        %v634 = vadd.f32 %v628, %v632
        %v635 = vadd.f32 %v629, %v633
        %s636 = sld [smem:[#allocation9 + $0x84]]
        %v637 = vstv %s636
        %v638 = vmul.f32 %v466, %v637
        %v639 = vmul.f32 %v467, %v637
        %v640 = vadd.f32 %v634, %v638
        %v641 = vadd.f32 %v635, %v639
        %s642 = sld [smem:[#allocation9 + $0x85]]
        %v643 = vstv %s642
        %v644 = vmul.f32 %v494, %v643
        %v645 = vmul.f32 %v495, %v643
        %v646 = vadd.f32 %v640, %v644
        %v647 = vadd.f32 %v641, %v645
        %s648 = sld [smem:[#allocation9 + $0x86]]
        %v649 = vstv %s648
        %v650 = vmul.f32 %v522, %v649
        %v651 = vmul.f32 %v523, %v649
        %v652 = vadd.f32 %v646, %v650
        %v653 = vadd.f32 %v647, %v651
        %s654 = sld [smem:[#allocation9 + $0x87]]
        %v655 = vstv %s654
        %v656 = vmul.f32 %v550, %v655
        %v657 = vmul.f32 %v551, %v655
        %v658 = vadd.f32 %v652, %v656
        %v659 = vadd.f32 %v653, %v657
        %s660 = sld [smem:[#allocation10 + $0x1]]
        %v661 = vstv %s660
        %v662 = vadd.f32 %v658, %v661
        %v663 = vadd.f32 %v659, %v661
        %v664 = vsub.f32 0.0, %v662
        %v665 = vsub.f32 0.0, %v663
        %v666 = vmul.f32 %v664, 1.442695
        %v667 = vpow.pop %v666
        %v668 = vmul.f32 %v665, 1.442695
        %v669 = vpow.pop %v668
        %v670 = vadd.f32 %v667, 1.0
        %v671 = vadd.f32 %v669, 1.0
        %v672 = vrcp.pop %v670
        %v673 = vrcp.pop %v671
        %s674 = scalar_lea.vmem %s314, 16 [#allocation12]
        %675 = vst [vmem:[%s674] sm:$0xff] %v672
        %676 = vst [vmem:[%s674 + $0x8] sm:$0xff] %v673
        %s677 = sld [smem:[#allocation9 + $0x100]]
        %v678 = vstv %s677
        %v679 = vmul.f32 %v354, %v678
        %v680 = vmul.f32 %v355, %v678
        %s681 = sld [smem:[#allocation9 + $0x101]]
        %v682 = vstv %s681
        %v683 = vmul.f32 %v382, %v682
        %v684 = vmul.f32 %v383, %v682
        %v685 = vadd.f32 %v679, %v683
        %v686 = vadd.f32 %v680, %v684
        %s687 = sld [smem:[#allocation9 + $0x102]]
        %v688 = vstv %s687
        %v689 = vmul.f32 %v410, %v688
        %v690 = vmul.f32 %v411, %v688
        %v691 = vadd.f32 %v685, %v689
        %v692 = vadd.f32 %v686, %v690
        %s693 = sld [smem:[#allocation9 + $0x103]]
        %v694 = vstv %s693
        %v695 = vmul.f32 %v438, %v694
        %v696 = vmul.f32 %v439, %v694
        %v697 = vadd.f32 %v691, %v695
        %v698 = vadd.f32 %v692, %v696
        %s699 = sld [smem:[#allocation9 + $0x104]]
        %v700 = vstv %s699
        %v701 = vmul.f32 %v466, %v700
        %v702 = vmul.f32 %v467, %v700
        %v703 = vadd.f32 %v697, %v701
        %v704 = vadd.f32 %v698, %v702
        %s705 = sld [smem:[#allocation9 + $0x105]]
        %v706 = vstv %s705
        %v707 = vmul.f32 %v494, %v706
        %v708 = vmul.f32 %v495, %v706
        %v709 = vadd.f32 %v703, %v707
        %v710 = vadd.f32 %v704, %v708
        %s711 = sld [smem:[#allocation9 + $0x106]]
        %v712 = vstv %s711
        %v713 = vmul.f32 %v522, %v712
        %v714 = vmul.f32 %v523, %v712
        %v715 = vadd.f32 %v709, %v713
        %v716 = vadd.f32 %v710, %v714
        %s717 = sld [smem:[#allocation9 + $0x107]]
        %v718 = vstv %s717
        %v719 = vmul.f32 %v550, %v718
        %v720 = vmul.f32 %v551, %v718
        %v721 = vadd.f32 %v715, %v719
        %v722 = vadd.f32 %v716, %v720
        %s723 = sld [smem:[#allocation10 + $0x2]]
        %v724 = vstv %s723
        %v725 = vadd.f32 %v721, %v724
        %v726 = vadd.f32 %v722, %v724
        %v727 = vsub.f32 0.0, %v725
        %v728 = vsub.f32 0.0, %v726
        %v729 = vmul.f32 %v727, 1.442695
        %v730 = vpow.pop %v729
        %v731 = vmul.f32 %v728, 1.442695
        %v732 = vpow.pop %v731
        %v733 = vadd.f32 %v730, 1.0
        %v734 = vadd.f32 %v732, 1.0
        %v735 = vrcp.pop %v733
        %v736 = vrcp.pop %v734
        %s737 = scalar_lea.vmem %s314, 32 [#allocation12]
        %738 = vst [vmem:[%s737] sm:$0xff] %v735
        %739 = vst [vmem:[%s737 + $0x8] sm:$0xff] %v736
        %s740 = sld [smem:[#allocation9 + $0x180]]
        %v741 = vstv %s740
        %v742 = vmul.f32 %v354, %v741
        %v743 = vmul.f32 %v355, %v741
        %s744 = sld [smem:[#allocation9 + $0x181]]
        %v745 = vstv %s744
        %v746 = vmul.f32 %v382, %v745
        %v747 = vmul.f32 %v383, %v745
        %v748 = vadd.f32 %v742, %v746
        %v749 = vadd.f32 %v743, %v747
        %s750 = sld [smem:[#allocation9 + $0x182]]
        %v751 = vstv %s750
        %v752 = vmul.f32 %v410, %v751
        %v753 = vmul.f32 %v411, %v751
        %v754 = vadd.f32 %v748, %v752
        %v755 = vadd.f32 %v749, %v753
        %s756 = sld [smem:[#allocation9 + $0x183]]
        %v757 = vstv %s756
        %v758 = vmul.f32 %v438, %v757
        %v759 = vmul.f32 %v439, %v757
        %v760 = vadd.f32 %v754, %v758
        %v761 = vadd.f32 %v755, %v759
        %s762 = sld [smem:[#allocation9 + $0x184]]
        %v763 = vstv %s762
        %v764 = vmul.f32 %v466, %v763
        %v765 = vmul.f32 %v467, %v763
        %v766 = vadd.f32 %v760, %v764
        %v767 = vadd.f32 %v761, %v765
        %s768 = sld [smem:[#allocation9 + $0x185]]
        %v769 = vstv %s768
        %v770 = vmul.f32 %v494, %v769
        %v771 = vmul.f32 %v495, %v769
        %v772 = vadd.f32 %v766, %v770
        %v773 = vadd.f32 %v767, %v771
        %s774 = sld [smem:[#allocation9 + $0x186]]
        %v775 = vstv %s774
        %v776 = vmul.f32 %v522, %v775
        %v777 = vmul.f32 %v523, %v775
        %v778 = vadd.f32 %v772, %v776
        %v779 = vadd.f32 %v773, %v777
        %s780 = sld [smem:[#allocation9 + $0x187]]
        %v781 = vstv %s780
        %v782 = vmul.f32 %v550, %v781
        %v783 = vmul.f32 %v551, %v781
        %v784 = vadd.f32 %v778, %v782
        %v785 = vadd.f32 %v779, %v783
        %s786 = sld [smem:[#allocation10 + $0x3]]
        %v787 = vstv %s786
        %v788 = vadd.f32 %v784, %v787
        %v789 = vadd.f32 %v785, %v787
        %v790 = vsub.f32 0.0, %v788
        %v791 = vsub.f32 0.0, %v789
        %v792 = vmul.f32 %v790, 1.442695
        %v793 = vpow.pop %v792
        %v794 = vmul.f32 %v791, 1.442695
        %v795 = vpow.pop %v794
        %v796 = vadd.f32 %v793, 1.0
        %v797 = vadd.f32 %v795, 1.0
        %v798 = vrcp.pop %v796
        %v799 = vrcp.pop %v797
        %s800 = scalar_lea.vmem %s314, 48 [#allocation12]
        %801 = vst [vmem:[%s800] sm:$0xff] %v798
        %802 = vst [vmem:[%s800 + $0x8] sm:$0xff] %v799
        %s803 = sand.u32 %s159, 1
        %s804 = scalar_lea.sflag [#allocation4], %s803
        %s805 = sand.u32 %s159, 1
        %s806 = smul.addr %s805, 64
        %s807 = scalar_lea.vmem [#allocation12], %s806
        // Predicated region
        $region61: #{tpu_custom_call.1} parent=39 // pred_check
          %p808 = pneg %p169
        $region62: #{tpu_custom_call.1} parent=39 // pred_check_branch
          %810 = sbr.rel (%p808) target = $region64
        $region63: #{tpu_custom_call.1} parent=39 // pred_region
          %s811 = smul.u32 2, %s30
          %813 = vsyncadd %s804, 0
          %s814 = smul.addr %s29, 8
          %s815 = sadd.s32 %s811, %s814
          %s816 = smul.addr %s815, 8
          %s817 = scalar_lea.hbm %s5, %s816
          %s818 = sshll.u32 %s807, 4
          %s819 = int_to_ptr.vmem [resolvable:$true] %s818
          %s820 = sshll.u32 %s817, 4
          %s821 = int_to_ptr.hbm [resolvable:$true] %s820
          %826 = dma.vmem_to_hbm [thread:$0]  %s819, 1024, %s821, %s804, 128, 128, 8
        $region64: #{tpu_custom_call.1} parent=39 // pred_fallthru
          _
      $region40: #{tpu_custom_call.1} parent=5 // pred_fallthru
        _
      %p827 = scmp.le.s32.totalorder 2, %s20
      // Predicated region
      $region65: #{tpu_custom_call.1} parent=5 // pred_check
        %p828 = pneg %p827
      $region66: #{tpu_custom_call.1} parent=5 // pred_check_branch
        %830 = sbr.rel (%p828) target = $region68
      $region67: #{tpu_custom_call.1} parent=5 // pred_region
        %s831 = ssub.s32 %s20, 2
        // Predicated region
        $region69: #{tpu_custom_call.1} parent=67 // pred_check
          %p832 = pneg %p175
        $region70: #{tpu_custom_call.1} parent=67 // pred_check_branch
          %834 = sbr.rel (%p832) target = $region72
        $region71: #{tpu_custom_call.1} parent=67 // pred_region
          %s835 = sand.u32 %s160, 1
          %s836 = scalar_lea.sflag [#allocation4], %s835
          %s837 = sand.u32 %s160, 1
          %s838 = smul.addr %s837, 64
          %s839 = scalar_lea.vmem [#allocation12], %s838
          %841 = dma.done %s836, 1024
        $region72: #{tpu_custom_call.1} parent=67 // pred_fallthru
          _
      $region68: #{tpu_custom_call.1} parent=5 // pred_fallthru
        _
    $region6: #{tpu_custom_call.1} parent=1 // loop_footer
      %s24 = sadd.s32 1, %s20
    $region7: #{tpu_custom_call.1} parent=1 // loop_footer_branch
      %19 = sbr.rel target = $region3
    $region8: #{tpu_custom_call.1} parent=1 // loop_exit
      _
    %842 = vsyncpa [#allocation3], 1
    %s843 = scalar_lea.sflag [#allocation3], 1
    %844 = vsyncpa %s843, 1
    %845 = vsyncpa [#allocation4], 1
    %s846 = scalar_lea.sflag [#allocation4], 1
    %847 = vsyncpa %s846, 1
    %848 = vsyncpa [#allocation5], 1
    %s849 = scalar_lea.sflag [#allocation5], 1
    %850 = vsyncpa %s849, 1
    %851 = vsyncpa [#allocation8], 1
    %852 = vsyncpa [#allocation11], 1

</llo_original>
